<compile_context>
chip_gen: v5e
topology: v5e:2x2
jax: 0.10.0
libtpu: 0.0.40
codegen_flags: <defaults>
</compile_context>

<pallas_src>
import jax
import jax.numpy as jnp
from jax.experimental import pallas as pl
from jax.experimental.pallas import tpu as pltpu  # noqa: F401  (kept for TPU-specific tuning hooks)

# ---------------- config (small, deterministic) ----------------
SHARED_DIM = 6
NUM_GOALS = 2
SINGLE_SEP = 5
SEP_DIM = NUM_GOALS * SINGLE_SEP          # 10
SINGLE_GOAL = 3
GOAL_DIM = NUM_GOALS * SINGLE_GOAL        # 6
ACTION_DIM = 4
STATE_DIM = SHARED_DIM + SEP_DIM + GOAL_DIM   # 22
NET_DIM = 32
N_HEAD = 2
HEAD_DIM = NET_DIM // N_HEAD              # 16
IN_DIM = SHARED_DIM + SINGLE_SEP + SINGLE_GOAL + ACTION_DIM  # 18
BATCH = 4
LN_EPS = 1e-5


# ---------------- Pallas kernel (single program, whole batch) ----------------
def critic_attn_kernel(x_ref,
                       we_ref, be_ref,
                       g1_ref, bt1_ref,
                       wqkv_ref, bqkv_ref,
                       wo_ref, bo_ref,
                       g2_ref, bt2_ref,
                       w1_ref, b1_ref,
                       w2_ref, b2_ref,
                       out_ref):
    BG = BATCH * NUM_GOALS

    def layer_norm(v, gamma, beta):
        mu = jnp.mean(v, axis=-1, keepdims=True)
        var = jnp.mean(jnp.square(v - mu), axis=-1, keepdims=True)
        return (v - mu) * jax.lax.rsqrt(var + LN_EPS) * gamma + beta

    # --- embed: Linear(IN_DIM, NET_DIM) + ReLU on all B*G rows at once ---
    x = x_ref[...]                                                     # (B*G, IN)
    src = jnp.maximum(
        jnp.dot(x, we_ref[...], preferred_element_type=jnp.float32) + be_ref[...], 0.0)

    # --- AttnEncoderLayer, pre_lnorm=True, dropout=0 ---
    pre = layer_norm(src, g1_ref[...], bt1_ref[...])                   # (B*G, D)

    # fused in-projection: one (D, 3D) matmul instead of three
    qkv = jnp.dot(pre, wqkv_ref[...], preferred_element_type=jnp.float32) + bqkv_ref[...]
    q = qkv[:, 0 * NET_DIM:1 * NET_DIM]
    k = qkv[:, 1 * NET_DIM:2 * NET_DIM]
    v = qkv[:, 2 * NET_DIM:3 * NET_DIM]

    scale = 1.0 / (HEAD_DIM ** 0.5)
    head_outs = []
    for h in range(N_HEAD):                                            # static unroll
        sl = slice(h * HEAD_DIM, (h + 1) * HEAD_DIM)
        qh = (q[:, sl] * scale).reshape(BATCH, NUM_GOALS, HEAD_DIM)
        kh = k[:, sl].reshape(BATCH, NUM_GOALS, HEAD_DIM)
        vh = v[:, sl].reshape(BATCH, NUM_GOALS, HEAD_DIM)
        s = jnp.einsum('bqd,bkd->bqk', qh, kh,
                       preferred_element_type=jnp.float32)             # (B, G, G)
        s = s - jnp.max(s, axis=-1, keepdims=True)
        p = jnp.exp(s)
        p = p / jnp.sum(p, axis=-1, keepdims=True)
        oh = jnp.einsum('bqk,bkd->bqd', p, vh,
                        preferred_element_type=jnp.float32)            # (B, G, hd)
        head_outs.append(oh.reshape(BG, HEAD_DIM))
    attn = jnp.concatenate(head_outs, axis=-1)                         # (B*G, D)
    token = jnp.dot(attn, wo_ref[...], preferred_element_type=jnp.float32) + bo_ref[...]
    src = src + token

    # position-wise FF with pre-LN
    pre2 = layer_norm(src, g2_ref[...], bt2_ref[...])
    ff = jnp.maximum(
        jnp.dot(pre2, w1_ref[...], preferred_element_type=jnp.float32) + b1_ref[...], 0.0)
    ff = jnp.dot(ff, w2_ref[...], preferred_element_type=jnp.float32) + b2_ref[...]
    src = src + ff

    # --- critic_pool_type='mean': mean over goals (all-valid mask) ---
    out_ref[...] = jnp.mean(src.reshape(BATCH, NUM_GOALS, NET_DIM), axis=1)


# ---------------- wrapper ----------------
def _assemble_input(state, action):
    """Plain-JAX glue reproducing the slicing/reshaping in CriticAttnBlock.forward."""
    B = state.shape[0]
    obj = state[:, SHARED_DIM:SHARED_DIM + SEP_DIM].reshape(B, NUM_GOALS, SINGLE_SEP)
    g = state[:, SHARED_DIM + SEP_DIM:SHARED_DIM + SEP_DIM + GOAL_DIM].reshape(
        B, NUM_GOALS, SINGLE_GOAL)
    grip = jnp.broadcast_to(state[:, None, :SHARED_DIM], (B, NUM_GOALS, SHARED_DIM))
    act = jnp.broadcast_to(action[:, None, :], (B, NUM_GOALS, ACTION_DIM))
    x = jnp.concatenate([grip, obj, g, act], axis=-1)    # (B, G, IN_DIM)
    return x.reshape(B * NUM_GOALS, IN_DIM)              # lane-dense 2-D slab


def critic_attn_forward(state, action, params):
    x = _assemble_input(state, action)
    args = [x,
            params['we'], params['be'],
            params['ln1_g'], params['ln1_b'],
            params['wqkv'], params['bqkv'],
            params['wo'], params['bo'],
            params['ln2_g'], params['ln2_b'],
            params['w1'], params['b1'],
            params['w2'], params['b2']]
    # Single program, no grid: every operand is a whole-array VMEM resident.
    return pl.pallas_call(
        critic_attn_kernel,
        out_shape=jax.ShapeDtypeStruct((BATCH, NET_DIM), jnp.float32),
    )(*args)


# ---------------- pure-JAX reference ----------------
def critic_attn_reference(state, action, params):
    B = state.shape[0]
    x = _assemble_input(state, action).reshape(B, NUM_GOALS, IN_DIM)
    src = jax.nn.relu(x @ params['we'] + params['be'][0])              # (B, G, D)

    def ln(v, g, b):
        mu = v.mean(-1, keepdims=True)
        var = ((v - mu) ** 2).mean(-1, keepdims=True)
        return (v - mu) * jax.lax.rsqrt(var + LN_EPS) * g + b

    pre = ln(src, params['ln1_g'][0], params['ln1_b'][0])
    qkv = pre @ params['wqkv'] + params['bqkv'][0]
    q, k, v = jnp.split(qkv, 3, axis=-1)
    qh = q.reshape(B, NUM_GOALS, N_HEAD, HEAD_DIM).transpose(0, 2, 1, 3)
    kh = k.reshape(B, NUM_GOALS, N_HEAD, HEAD_DIM).transpose(0, 2, 1, 3)
    vh = v.reshape(B, NUM_GOALS, N_HEAD, HEAD_DIM).transpose(0, 2, 1, 3)
    s = jnp.einsum('bhqd,bhkd->bhqk', qh, kh) * (1.0 / (HEAD_DIM ** 0.5))
    p = jax.nn.softmax(s, axis=-1)
    o = jnp.einsum('bhqk,bhkd->bhqd', p, vh).transpose(0, 2, 1, 3).reshape(
        B, NUM_GOALS, NET_DIM)
    token = o @ params['wo'] + params['bo'][0]
    src = src + token
    pre2 = ln(src, params['ln2_g'][0], params['ln2_b'][0])
    ff = jax.nn.relu(pre2 @ params['w1'] + params['b1'][0]) @ params['w2'] + params['b2'][0]
    src = src + ff
    return src.mean(axis=1)                                            # (B, D)


# ---------------- deterministic parameter init ----------------
def init_params(key):
    ks = jax.random.split(key, 14)
    s = 0.2

    def lin(kw, fan_in, fan_out):
        return s * jax.random.normal(kw, (fan_in, fan_out), jnp.float32)

    def bias(kw, fan_out):
        return s * jax.random.normal(kw, (1, fan_out), jnp.float32)

    return {
        'we': lin(ks[0], IN_DIM, NET_DIM), 'be': bias(ks[1], NET_DIM),
        'ln1_g': 1.0 + 0.1 * jax.random.normal(ks[2], (1, NET_DIM), jnp.float32),
        'ln1_b': 0.1 * jax.random.normal(ks[3], (1, NET_DIM), jnp.float32),
        'wqkv': lin(ks[4], NET_DIM, 3 * NET_DIM), 'bqkv': bias(ks[5], 3 * NET_DIM),
        'wo': lin(ks[6], NET_DIM, NET_DIM), 'bo': bias(ks[7], NET_DIM),
        'ln2_g': 1.0 + 0.1 * jax.random.normal(ks[8], (1, NET_DIM), jnp.float32),
        'ln2_b': 0.1 * jax.random.normal(ks[9], (1, NET_DIM), jnp.float32),
        'w1': lin(ks[10], NET_DIM, NET_DIM), 'b1': bias(ks[11], NET_DIM),
        'w2': lin(ks[12], NET_DIM, NET_DIM), 'b2': bias(ks[13], NET_DIM),
    }


if __name__ == "__main__":
    root = jax.random.PRNGKey(0)
    k_param, k_state, k_action = jax.random.split(root, 3)

    params = init_params(k_param)
    state = jax.random.normal(k_state, (BATCH, STATE_DIM), jnp.float32)
    action = jax.random.normal(k_action, (BATCH, ACTION_DIM), jnp.float32)

    out = jax.block_until_ready(critic_attn_forward(state, action, params))
    ref = jax.block_until_ready(critic_attn_reference(state, action, params))

    assert out.shape == (BATCH, NET_DIM), out.shape
    assert jnp.allclose(out, ref, atol=1e-4, rtol=1e-4), (out, ref)
    print("KERNEL_OK")
</pallas_src>

<mosaic_0001>
module attributes {stable_mosaic.version = 11 : i64} {
  func.func @critic_attn_kernel(%arg0: memref<8x18xf32, #tpu.memory_space<vmem>>, %arg1: memref<18x32xf32, #tpu.memory_space<vmem>>, %arg2: memref<1x32xf32, #tpu.memory_space<vmem>>, %arg3: memref<1x32xf32, #tpu.memory_space<vmem>>, %arg4: memref<1x32xf32, #tpu.memory_space<vmem>>, %arg5: memref<32x96xf32, #tpu.memory_space<vmem>>, %arg6: memref<1x96xf32, #tpu.memory_space<vmem>>, %arg7: memref<32x32xf32, #tpu.memory_space<vmem>>, %arg8: memref<1x32xf32, #tpu.memory_space<vmem>>, %arg9: memref<1x32xf32, #tpu.memory_space<vmem>>, %arg10: memref<1x32xf32, #tpu.memory_space<vmem>>, %arg11: memref<32x32xf32, #tpu.memory_space<vmem>>, %arg12: memref<1x32xf32, #tpu.memory_space<vmem>>, %arg13: memref<32x32xf32, #tpu.memory_space<vmem>>, %arg14: memref<1x32xf32, #tpu.memory_space<vmem>>, %arg15: memref<4x32xf32, #tpu.memory_space<vmem>>) attributes {dimension_semantics = [], scalar_prefetch = 0 : i64, scratch_operands = 0 : i64, tpu.core_type = #tpu.core_type<tc>} {
    %c0 = arith.constant 0 : index
    %c0_0 = arith.constant 0 : index
    %0 = vector.load %arg0[%c0, %c0_0] : memref<8x18xf32, #tpu.memory_space<vmem>>, vector<8x18xf32>
    %c0_1 = arith.constant 0 : index
    %c0_2 = arith.constant 0 : index
    %1 = vector.load %arg1[%c0_1, %c0_2] : memref<18x32xf32, #tpu.memory_space<vmem>>, vector<18x32xf32>
    %cst = arith.constant dense<0.000000e+00> : vector<8x32xf32>
    %2 = tpu.matmul %0, %1, %cst {dimension_numbers = #tpu.dot_dimension_numbers<[1], [0], [0], [1], [0, 0, 1, 1], [], []>} : vector<8x18xf32>, vector<18x32xf32>, vector<8x32xf32> -> vector<8x32xf32>
    %c0_3 = arith.constant 0 : index
    %c0_4 = arith.constant 0 : index
    %3 = vector.load %arg2[%c0_3, %c0_4] : memref<1x32xf32, #tpu.memory_space<vmem>>, vector<1x32xf32>
    %4 = vector.broadcast %3 : vector<1x32xf32> to vector<8x32xf32>
    %5 = arith.addf %2, %4 : vector<8x32xf32>
    %cst_5 = arith.constant 0.000000e+00 : f32
    %6 = vector.broadcast %cst_5 : f32 to vector<8x32xf32>
    %7 = arith.maximumf %5, %6 : vector<8x32xf32>
    %c0_6 = arith.constant 0 : index
    %c0_7 = arith.constant 0 : index
    %8 = vector.load %arg3[%c0_6, %c0_7] : memref<1x32xf32, #tpu.memory_space<vmem>>, vector<1x32xf32>
    %c0_8 = arith.constant 0 : index
    %c0_9 = arith.constant 0 : index
    %9 = vector.load %arg4[%c0_8, %c0_9] : memref<1x32xf32, #tpu.memory_space<vmem>>, vector<1x32xf32>
    %cst_10 = arith.constant dense<0.000000e+00> : vector<8xf32>
    %10 = vector.multi_reduction <add>, %7, %cst_10 [1] : vector<8x32xf32> to vector<8xf32>
    %11 = vector.shape_cast %10 : vector<8xf32> to vector<8x1xf32>
    %cst_11 = arith.constant 3.200000e+01 : f32
    %12 = vector.broadcast %cst_11 : f32 to vector<8x1xf32>
    %13 = arith.divf %11, %12 : vector<8x1xf32>
    %14 = vector.broadcast %13 : vector<8x1xf32> to vector<8x32xf32>
    %15 = arith.subf %7, %14 : vector<8x32xf32>
    %16 = arith.mulf %15, %15 : vector<8x32xf32>
    %cst_12 = arith.constant dense<0.000000e+00> : vector<8xf32>
    %17 = vector.multi_reduction <add>, %16, %cst_12 [1] : vector<8x32xf32> to vector<8xf32>
    %18 = vector.shape_cast %17 : vector<8xf32> to vector<8x1xf32>
    %cst_13 = arith.constant 3.200000e+01 : f32
    %19 = vector.broadcast %cst_13 : f32 to vector<8x1xf32>
    %20 = arith.divf %18, %19 : vector<8x1xf32>
    %21 = vector.broadcast %13 : vector<8x1xf32> to vector<8x32xf32>
    %22 = arith.subf %7, %21 : vector<8x32xf32>
    %cst_14 = arith.constant 9.99999974E-6 : f32
    %23 = vector.broadcast %cst_14 : f32 to vector<8x1xf32>
    %24 = arith.addf %20, %23 : vector<8x1xf32>
    %25 = math.rsqrt %24 : vector<8x1xf32>
    %26 = vector.broadcast %25 : vector<8x1xf32> to vector<8x32xf32>
    %27 = arith.mulf %22, %26 : vector<8x32xf32>
    %28 = vector.broadcast %8 : vector<1x32xf32> to vector<8x32xf32>
    %29 = arith.mulf %27, %28 : vector<8x32xf32>
    %30 = vector.broadcast %9 : vector<1x32xf32> to vector<8x32xf32>
    %31 = arith.addf %29, %30 : vector<8x32xf32>
    %c0_15 = arith.constant 0 : index
    %c0_16 = arith.constant 0 : index
    %32 = vector.load %arg5[%c0_15, %c0_16] : memref<32x96xf32, #tpu.memory_space<vmem>>, vector<32x96xf32>
    %cst_17 = arith.constant dense<0.000000e+00> : vector<8x96xf32>
    %33 = tpu.matmul %31, %32, %cst_17 {dimension_numbers = #tpu.dot_dimension_numbers<[1], [0], [0], [1], [0, 0, 1, 1], [], []>} : vector<8x32xf32>, vector<32x96xf32>, vector<8x96xf32> -> vector<8x96xf32>
    %c0_18 = arith.constant 0 : index
    %c0_19 = arith.constant 0 : index
    %34 = vector.load %arg6[%c0_18, %c0_19] : memref<1x96xf32, #tpu.memory_space<vmem>>, vector<1x96xf32>
    %35 = vector.broadcast %34 : vector<1x96xf32> to vector<8x96xf32>
    %36 = arith.addf %33, %35 : vector<8x96xf32>
    %37 = vector.extract_strided_slice %36 {offsets = [0, 0], sizes = [8, 32], strides = [1, 1]} : vector<8x96xf32> to vector<8x32xf32>
    %38 = vector.extract_strided_slice %36 {offsets = [0, 32], sizes = [8, 32], strides = [1, 1]} : vector<8x96xf32> to vector<8x32xf32>
    %39 = vector.extract_strided_slice %36 {offsets = [0, 64], sizes = [8, 32], strides = [1, 1]} : vector<8x96xf32> to vector<8x32xf32>
    %40 = vector.extract_strided_slice %37 {offsets = [0, 0], sizes = [8, 16], strides = [1, 1]} : vector<8x32xf32> to vector<8x16xf32>
    %cst_20 = arith.constant 2.500000e-01 : f32
    %41 = vector.broadcast %cst_20 : f32 to vector<8x16xf32>
    %42 = arith.mulf %40, %41 : vector<8x16xf32>
    %43 = vector.shape_cast %42 : vector<8x16xf32> to vector<4x2x16xf32>
    %44 = vector.extract_strided_slice %38 {offsets = [0, 0], sizes = [8, 16], strides = [1, 1]} : vector<8x32xf32> to vector<8x16xf32>
    %45 = vector.shape_cast %44 : vector<8x16xf32> to vector<4x2x16xf32>
    %46 = vector.extract_strided_slice %39 {offsets = [0, 0], sizes = [8, 16], strides = [1, 1]} : vector<8x32xf32> to vector<8x16xf32>
    %47 = vector.shape_cast %46 : vector<8x16xf32> to vector<4x2x16xf32>
    "tpu.trace_start"() <{level = 10 : i32, message = "bqd,bkd->bqk"}> : () -> ()
    %cst_21 = arith.constant dense<0.000000e+00> : vector<4x2x2xf32>
    %48 = tpu.matmul %43, %45, %cst_21 {dimension_numbers = #tpu.dot_dimension_numbers<[2], [2], [1], [1], [0, 0, 0, 1, 1, 1], [0], [0]>} : vector<4x2x16xf32>, vector<4x2x16xf32>, vector<4x2x2xf32> -> vector<4x2x2xf32>
    "tpu.trace_stop"() : () -> ()
    %cst_22 = arith.constant dense<0xFF800000> : vector<4x2xf32>
    %49 = vector.multi_reduction <maximumf>, %48, %cst_22 [2] : vector<4x2x2xf32> to vector<4x2xf32>
    %50 = vector.shape_cast %49 : vector<4x2xf32> to vector<4x2x1xf32>
    %51 = vector.broadcast %50 : vector<4x2x1xf32> to vector<4x2x2xf32>
    %52 = arith.subf %48, %51 : vector<4x2x2xf32>
    %53 = math.exp %52 : vector<4x2x2xf32>
    %cst_23 = arith.constant dense<0.000000e+00> : vector<4x2xf32>
    %54 = vector.multi_reduction <add>, %53, %cst_23 [2] : vector<4x2x2xf32> to vector<4x2xf32>
    %55 = vector.shape_cast %54 : vector<4x2xf32> to vector<4x2x1xf32>
    %56 = vector.broadcast %55 : vector<4x2x1xf32> to vector<4x2x2xf32>
    %57 = arith.divf %53, %56 : vector<4x2x2xf32>
    "tpu.trace_start"() <{level = 10 : i32, message = "bqk,bkd->bqd"}> : () -> ()
    %cst_24 = arith.constant dense<0.000000e+00> : vector<4x2x16xf32>
    %58 = tpu.matmul %57, %47, %cst_24 {dimension_numbers = #tpu.dot_dimension_numbers<[2], [1], [1], [2], [0, 0, 0, 1, 1, 2], [0], [0]>} : vector<4x2x2xf32>, vector<4x2x16xf32>, vector<4x2x16xf32> -> vector<4x2x16xf32>
    "tpu.trace_stop"() : () -> ()
    %59 = vector.shape_cast %58 : vector<4x2x16xf32> to vector<8x16xf32>
    %60 = vector.extract_strided_slice %37 {offsets = [0, 16], sizes = [8, 16], strides = [1, 1]} : vector<8x32xf32> to vector<8x16xf32>
    %cst_25 = arith.constant 2.500000e-01 : f32
    %61 = vector.broadcast %cst_25 : f32 to vector<8x16xf32>
    %62 = arith.mulf %60, %61 : vector<8x16xf32>
    %63 = vector.shape_cast %62 : vector<8x16xf32> to vector<4x2x16xf32>
    %64 = vector.extract_strided_slice %38 {offsets = [0, 16], sizes = [8, 16], strides = [1, 1]} : vector<8x32xf32> to vector<8x16xf32>
    %65 = vector.shape_cast %64 : vector<8x16xf32> to vector<4x2x16xf32>
    %66 = vector.extract_strided_slice %39 {offsets = [0, 16], sizes = [8, 16], strides = [1, 1]} : vector<8x32xf32> to vector<8x16xf32>
    %67 = vector.shape_cast %66 : vector<8x16xf32> to vector<4x2x16xf32>
    "tpu.trace_start"() <{level = 10 : i32, message = "bqd,bkd->bqk"}> : () -> ()
    %cst_26 = arith.constant dense<0.000000e+00> : vector<4x2x2xf32>
    %68 = tpu.matmul %63, %65, %cst_26 {dimension_numbers = #tpu.dot_dimension_numbers<[2], [2], [1], [1], [0, 0, 0, 1, 1, 1], [0], [0]>} : vector<4x2x16xf32>, vector<4x2x16xf32>, vector<4x2x2xf32> -> vector<4x2x2xf32>
    "tpu.trace_stop"() : () -> ()
    %cst_27 = arith.constant dense<0xFF800000> : vector<4x2xf32>
    %69 = vector.multi_reduction <maximumf>, %68, %cst_27 [2] : vector<4x2x2xf32> to vector<4x2xf32>
    %70 = vector.shape_cast %69 : vector<4x2xf32> to vector<4x2x1xf32>
    %71 = vector.broadcast %70 : vector<4x2x1xf32> to vector<4x2x2xf32>
    %72 = arith.subf %68, %71 : vector<4x2x2xf32>
    %73 = math.exp %72 : vector<4x2x2xf32>
    %cst_28 = arith.constant dense<0.000000e+00> : vector<4x2xf32>
    %74 = vector.multi_reduction <add>, %73, %cst_28 [2] : vector<4x2x2xf32> to vector<4x2xf32>
    %75 = vector.shape_cast %74 : vector<4x2xf32> to vector<4x2x1xf32>
    %76 = vector.broadcast %75 : vector<4x2x1xf32> to vector<4x2x2xf32>
    %77 = arith.divf %73, %76 : vector<4x2x2xf32>
    "tpu.trace_start"() <{level = 10 : i32, message = "bqk,bkd->bqd"}> : () -> ()
    %cst_29 = arith.constant dense<0.000000e+00> : vector<4x2x16xf32>
    %78 = tpu.matmul %77, %67, %cst_29 {dimension_numbers = #tpu.dot_dimension_numbers<[2], [1], [1], [2], [0, 0, 0, 1, 1, 2], [0], [0]>} : vector<4x2x2xf32>, vector<4x2x16xf32>, vector<4x2x16xf32> -> vector<4x2x16xf32>
    "tpu.trace_stop"() : () -> ()
    %79 = vector.shape_cast %78 : vector<4x2x16xf32> to vector<8x16xf32>
    %80 = tpu.concatenate %59, %79 in 1 : vector<8x16xf32>, vector<8x16xf32> -> vector<8x32xf32>
    %c0_30 = arith.constant 0 : index
    %c0_31 = arith.constant 0 : index
    %81 = vector.load %arg7[%c0_30, %c0_31] : memref<32x32xf32, #tpu.memory_space<vmem>>, vector<32x32xf32>
    %cst_32 = arith.constant dense<0.000000e+00> : vector<8x32xf32>
    %82 = tpu.matmul %80, %81, %cst_32 {dimension_numbers = #tpu.dot_dimension_numbers<[1], [0], [0], [1], [0, 0, 1, 1], [], []>} : vector<8x32xf32>, vector<32x32xf32>, vector<8x32xf32> -> vector<8x32xf32>
    %c0_33 = arith.constant 0 : index
    %c0_34 = arith.constant 0 : index
    %83 = vector.load %arg8[%c0_33, %c0_34] : memref<1x32xf32, #tpu.memory_space<vmem>>, vector<1x32xf32>
    %84 = vector.broadcast %83 : vector<1x32xf32> to vector<8x32xf32>
    %85 = arith.addf %82, %84 : vector<8x32xf32>
    %86 = arith.addf %7, %85 : vector<8x32xf32>
    %c0_35 = arith.constant 0 : index
    %c0_36 = arith.constant 0 : index
    %87 = vector.load %arg9[%c0_35, %c0_36] : memref<1x32xf32, #tpu.memory_space<vmem>>, vector<1x32xf32>
    %c0_37 = arith.constant 0 : index
    %c0_38 = arith.constant 0 : index
    %88 = vector.load %arg10[%c0_37, %c0_38] : memref<1x32xf32, #tpu.memory_space<vmem>>, vector<1x32xf32>
    %cst_39 = arith.constant dense<0.000000e+00> : vector<8xf32>
    %89 = vector.multi_reduction <add>, %86, %cst_39 [1] : vector<8x32xf32> to vector<8xf32>
    %90 = vector.shape_cast %89 : vector<8xf32> to vector<8x1xf32>
    %cst_40 = arith.constant 3.200000e+01 : f32
    %91 = vector.broadcast %cst_40 : f32 to vector<8x1xf32>
    %92 = arith.divf %90, %91 : vector<8x1xf32>
    %93 = vector.broadcast %92 : vector<8x1xf32> to vector<8x32xf32>
    %94 = arith.subf %86, %93 : vector<8x32xf32>
    %95 = arith.mulf %94, %94 : vector<8x32xf32>
    %cst_41 = arith.constant dense<0.000000e+00> : vector<8xf32>
    %96 = vector.multi_reduction <add>, %95, %cst_41 [1] : vector<8x32xf32> to vector<8xf32>
    %97 = vector.shape_cast %96 : vector<8xf32> to vector<8x1xf32>
    %cst_42 = arith.constant 3.200000e+01 : f32
    %98 = vector.broadcast %cst_42 : f32 to vector<8x1xf32>
    %99 = arith.divf %97, %98 : vector<8x1xf32>
    %100 = vector.broadcast %92 : vector<8x1xf32> to vector<8x32xf32>
    %101 = arith.subf %86, %100 : vector<8x32xf32>
    %cst_43 = arith.constant 9.99999974E-6 : f32
    %102 = vector.broadcast %cst_43 : f32 to vector<8x1xf32>
    %103 = arith.addf %99, %102 : vector<8x1xf32>
    %104 = math.rsqrt %103 : vector<8x1xf32>
    %105 = vector.broadcast %104 : vector<8x1xf32> to vector<8x32xf32>
    %106 = arith.mulf %101, %105 : vector<8x32xf32>
    %107 = vector.broadcast %87 : vector<1x32xf32> to vector<8x32xf32>
    %108 = arith.mulf %106, %107 : vector<8x32xf32>
    %109 = vector.broadcast %88 : vector<1x32xf32> to vector<8x32xf32>
    %110 = arith.addf %108, %109 : vector<8x32xf32>
    %c0_44 = arith.constant 0 : index
    %c0_45 = arith.constant 0 : index
    %111 = vector.load %arg11[%c0_44, %c0_45] : memref<32x32xf32, #tpu.memory_space<vmem>>, vector<32x32xf32>
    %cst_46 = arith.constant dense<0.000000e+00> : vector<8x32xf32>
    %112 = tpu.matmul %110, %111, %cst_46 {dimension_numbers = #tpu.dot_dimension_numbers<[1], [0], [0], [1], [0, 0, 1, 1], [], []>} : vector<8x32xf32>, vector<32x32xf32>, vector<8x32xf32> -> vector<8x32xf32>
    %c0_47 = arith.constant 0 : index
    %c0_48 = arith.constant 0 : index
    %113 = vector.load %arg12[%c0_47, %c0_48] : memref<1x32xf32, #tpu.memory_space<vmem>>, vector<1x32xf32>
    %114 = vector.broadcast %113 : vector<1x32xf32> to vector<8x32xf32>
    %115 = arith.addf %112, %114 : vector<8x32xf32>
    %cst_49 = arith.constant 0.000000e+00 : f32
    %116 = vector.broadcast %cst_49 : f32 to vector<8x32xf32>
    %117 = arith.maximumf %115, %116 : vector<8x32xf32>
    %c0_50 = arith.constant 0 : index
    %c0_51 = arith.constant 0 : index
    %118 = vector.load %arg13[%c0_50, %c0_51] : memref<32x32xf32, #tpu.memory_space<vmem>>, vector<32x32xf32>
    %cst_52 = arith.constant dense<0.000000e+00> : vector<8x32xf32>
    %119 = tpu.matmul %117, %118, %cst_52 {dimension_numbers = #tpu.dot_dimension_numbers<[1], [0], [0], [1], [0, 0, 1, 1], [], []>} : vector<8x32xf32>, vector<32x32xf32>, vector<8x32xf32> -> vector<8x32xf32>
    %c0_53 = arith.constant 0 : index
    %c0_54 = arith.constant 0 : index
    %120 = vector.load %arg14[%c0_53, %c0_54] : memref<1x32xf32, #tpu.memory_space<vmem>>, vector<1x32xf32>
    %121 = vector.broadcast %120 : vector<1x32xf32> to vector<8x32xf32>
    %122 = arith.addf %119, %121 : vector<8x32xf32>
    %123 = arith.addf %86, %122 : vector<8x32xf32>
    %124 = vector.shape_cast %123 : vector<8x32xf32> to vector<4x2x32xf32>
    %cst_55 = arith.constant dense<0.000000e+00> : vector<4x32xf32>
    %125 = vector.multi_reduction <add>, %124, %cst_55 [1] : vector<4x2x32xf32> to vector<4x32xf32>
    %cst_56 = arith.constant 2.000000e+00 : f32
    %126 = vector.broadcast %cst_56 : f32 to vector<4x32xf32>
    %127 = arith.divf %125, %126 : vector<4x32xf32>
    %c0_57 = arith.constant 0 : index
    %c0_58 = arith.constant 0 : index
    %128 = vector.load %arg15[%c0_57, %c0_58] : memref<4x32xf32, #tpu.memory_space<vmem>>, vector<4x32xf32>
    tpu.vector_store %arg15[%c0_57, %c0_58], %127 {strides = array<i32>} : memref<4x32xf32, #tpu.memory_space<vmem>>, vector<4x32xf32>,
    return
  }
}

</mosaic_0001>

<llo_original>
// kernel: tpu_custom_call.1
$region0: #{tpu_custom_call.1}
  #allocation0 [shape = 'u32[]', space=smem, size = 0x4, offset = 0x4, fixed_abs, tag = 'smem constant byte address 0x4 - core index']
  #allocation1 [shape = 'u32[72,128]{1,0:T(1,128)}', space=vmem, size = 0x9000, scoped, tag = 'internal scratch']
  %s0 = inlined_call_operand.hbm [shape: f32[8,18], index: 0, kind: input, shape index: {}]
  %s1 = inlined_call_operand.hbm [shape: f32[18,32], index: 1, kind: input, shape index: {}]
  %s2 = inlined_call_operand.vmem [shape: f32[1,32], index: 2, kind: input, shape index: {}]
  %s3 = inlined_call_operand.vmem [shape: f32[1,32], index: 3, kind: input, shape index: {}]
  %s4 = inlined_call_operand.vmem [shape: f32[1,32], index: 4, kind: input, shape index: {}]
  %s5 = inlined_call_operand.hbm [shape: f32[32,96], index: 5, kind: input, shape index: {}]
  %s6 = inlined_call_operand.vmem [shape: f32[1,96], index: 6, kind: input, shape index: {}]
  %s7 = inlined_call_operand.hbm [shape: f32[32,32], index: 7, kind: input, shape index: {}]
  %s8 = inlined_call_operand.vmem [shape: f32[1,32], index: 8, kind: input, shape index: {}]
  %s9 = inlined_call_operand.vmem [shape: f32[1,32], index: 9, kind: input, shape index: {}]
  %s10 = inlined_call_operand.vmem [shape: f32[1,32], index: 10, kind: input, shape index: {}]
  %s11 = inlined_call_operand.hbm [shape: f32[32,32], index: 11, kind: input, shape index: {}]
  %s12 = inlined_call_operand.vmem [shape: f32[1,32], index: 12, kind: input, shape index: {}]
  %s13 = inlined_call_operand.hbm [shape: f32[32,32], index: 13, kind: input, shape index: {}]
  %s14 = inlined_call_operand.vmem [shape: f32[1,32], index: 14, kind: input, shape index: {}]
  %s15 = inlined_call_operand.hbm [shape: f32[4,32], index: 15, kind: output, shape index: {}]
  %s16 = sld [smem:[#allocation0]]
  $region94: #{tpu_custom_call.1} parent=0
    _
  %s18 = ssub.s32 1, %s16
  %s19 = scalar_select 0, %s18, %s16
  $region1: #{tpu_custom_call.1} parent=0
    #allocation2 [shape = 'u8[4096]{0}', space=vmem, size = 0x1000, scoped, tag = 'input window, operand 0, single buffered']
    #allocation3 [shape = 's32[1]{0}', space=sflag, size = 0x4, scoped, tag = 'scoped memory for tpu_custom_call.1']
    #allocation4 [shape = 's32[1]{0}', space=sflag, size = 0x4, scoped, tag = 'scoped memory for tpu_custom_call.1']
    #allocation5 [shape = 'u8[12288]{0}', space=vmem, size = 0x3000, scoped, tag = 'input window, operand 1, single buffered']
    #allocation6 [shape = 's32[1]{0}', space=sflag, size = 0x4, scoped, tag = 'scoped memory for tpu_custom_call.1']
    #allocation7 [shape = 'u8[16384]{0}', space=vmem, size = 0x4000, scoped, tag = 'input window, operand 5, single buffered']
    #allocation8 [shape = 'u8[16384]{0}', space=vmem, size = 0x4000, scoped, tag = 'input window, operand 7, single buffered']
    #allocation9 [shape = 's32[1]{0}', space=sflag, size = 0x4, scoped, tag = 'scoped memory for tpu_custom_call.1']
    #allocation10 [shape = 'u8[16384]{0}', space=vmem, size = 0x4000, scoped, tag = 'input window, operand 11, single buffered']
    #allocation11 [shape = 'u8[16384]{0}', space=vmem, size = 0x4000, scoped, tag = 'input window, operand 13, single buffered']
    #allocation12 [shape = 's32[1]{0}', space=sflag, size = 0x4, scoped, tag = 'scoped memory for tpu_custom_call.1']
    #allocation13 [shape = 'u8[2048]{0}', space=vmem, size = 0x800, scoped, tag = 'output window, operand 0, single buffered']
    %20 = vsyncpa [#allocation3], 0
    %21 = vsyncpa [#allocation6], 0
    %22 = vsyncpa [#allocation9], 0
    %23 = vsyncpa [#allocation12], 0
    %24 = vsyncpa [#allocation4], 0
    // Predicated region
    $region2: #{tpu_custom_call.1} parent=1 // pred_check
      _
    $region3: #{tpu_custom_call.1} parent=1 // pred_check_branch
      %26 = sbr.rel (0) target = $region5
    $region4: #{tpu_custom_call.1} parent=1 // pred_region
      %28 = vsyncadd [#allocation3], 0
      %s30 = sshll.u32 %s0, 4
      %s31 = int_to_ptr.hbm [resolvable:$true] %s30
      %s32 = sshll.u32 [#allocation2], 4
      %s33 = int_to_ptr.vmem [resolvable:$true] %s32
      %35 = dma.hbm_to_vmem [thread:$0]  %s31, 128, %s33, [#allocation3]
    $region5: #{tpu_custom_call.1} parent=1 // pred_fallthru
      _
    // Predicated region
    $region6: #{tpu_custom_call.1} parent=1 // pred_check
      _
    $region7: #{tpu_custom_call.1} parent=1 // pred_check_branch
      %37 = sbr.rel (0) target = $region9
    $region8: #{tpu_custom_call.1} parent=1 // pred_region
      %39 = vsyncadd [#allocation6], 0
      %s40 = sshll.u32 %s1, 4
      %s41 = int_to_ptr.hbm [resolvable:$true] %s40
      %s42 = sshll.u32 [#allocation5], 4
      %s43 = int_to_ptr.vmem [resolvable:$true] %s42
      %48 = dma.hbm_to_vmem [thread:$0]  %s41, 384, %s43, [#allocation6], 128, 128, 8
    $region9: #{tpu_custom_call.1} parent=1 // pred_fallthru
      _
    // Predicated region
    $region10: #{tpu_custom_call.1} parent=1 // pred_check
      _
    $region11: #{tpu_custom_call.1} parent=1 // pred_check_branch
      %50 = sbr.rel (0) target = $region13
    $region12: #{tpu_custom_call.1} parent=1 // pred_region
      _
    $region13: #{tpu_custom_call.1} parent=1 // pred_fallthru
      _
    // Predicated region
    $region14: #{tpu_custom_call.1} parent=1 // pred_check
      _
    $region15: #{tpu_custom_call.1} parent=1 // pred_check_branch
      %52 = sbr.rel (0) target = $region17
    $region16: #{tpu_custom_call.1} parent=1 // pred_region
      _
    $region17: #{tpu_custom_call.1} parent=1 // pred_fallthru
      _
    // Predicated region
    $region18: #{tpu_custom_call.1} parent=1 // pred_check
      _
    $region19: #{tpu_custom_call.1} parent=1 // pred_check_branch
      %54 = sbr.rel (0) target = $region21
    $region20: #{tpu_custom_call.1} parent=1 // pred_region
      _
    $region21: #{tpu_custom_call.1} parent=1 // pred_fallthru
      _
    // Predicated region
    $region22: #{tpu_custom_call.1} parent=1 // pred_check
      _
    $region23: #{tpu_custom_call.1} parent=1 // pred_check_branch
      %56 = sbr.rel (0) target = $region25
    $region24: #{tpu_custom_call.1} parent=1 // pred_region
      %58 = vsyncadd [#allocation6], 0
      %s59 = sshll.u32 %s5, 4
      %s60 = int_to_ptr.hbm [resolvable:$true] %s59
      %s61 = sshll.u32 [#allocation7], 4
      %s62 = int_to_ptr.vmem [resolvable:$true] %s61
      %67 = dma.hbm_to_vmem [thread:$0]  %s60, 512, %s62, [#allocation6], 128, 128, 8
    $region25: #{tpu_custom_call.1} parent=1 // pred_fallthru
      _
    // Predicated region
    $region26: #{tpu_custom_call.1} parent=1 // pred_check
      _
    $region27: #{tpu_custom_call.1} parent=1 // pred_check_branch
      %69 = sbr.rel (0) target = $region29
    $region28: #{tpu_custom_call.1} parent=1 // pred_region
      _
    $region29: #{tpu_custom_call.1} parent=1 // pred_fallthru
      _
    // Predicated region
    $region30: #{tpu_custom_call.1} parent=1 // pred_check
      _
    $region31: #{tpu_custom_call.1} parent=1 // pred_check_branch
      %71 = sbr.rel (0) target = $region33
    $region32: #{tpu_custom_call.1} parent=1 // pred_region
      %73 = vsyncadd [#allocation9], 0
      %s74 = sshll.u32 %s7, 4
      %s75 = int_to_ptr.hbm [resolvable:$true] %s74
      %s76 = sshll.u32 [#allocation8], 4
      %s77 = int_to_ptr.vmem [resolvable:$true] %s76
      %82 = dma.hbm_to_vmem [thread:$0]  %s75, 512, %s77, [#allocation9], 128, 128, 8
    $region33: #{tpu_custom_call.1} parent=1 // pred_fallthru
      _
    // Predicated region
    $region34: #{tpu_custom_call.1} parent=1 // pred_check
      _
    $region35: #{tpu_custom_call.1} parent=1 // pred_check_branch
      %84 = sbr.rel (0) target = $region37
    $region36: #{tpu_custom_call.1} parent=1 // pred_region
      _
    $region37: #{tpu_custom_call.1} parent=1 // pred_fallthru
      _
    // Predicated region
    $region38: #{tpu_custom_call.1} parent=1 // pred_check
      _
    $region39: #{tpu_custom_call.1} parent=1 // pred_check_branch
      %86 = sbr.rel (0) target = $region41
    $region40: #{tpu_custom_call.1} parent=1 // pred_region
      _
    $region41: #{tpu_custom_call.1} parent=1 // pred_fallthru
      _
    // Predicated region
    $region42: #{tpu_custom_call.1} parent=1 // pred_check
      _
    $region43: #{tpu_custom_call.1} parent=1 // pred_check_branch
      %88 = sbr.rel (0) target = $region45
    $region44: #{tpu_custom_call.1} parent=1 // pred_region
      _
    $region45: #{tpu_custom_call.1} parent=1 // pred_fallthru
      _
    // Predicated region
    $region46: #{tpu_custom_call.1} parent=1 // pred_check
      _
    $region47: #{tpu_custom_call.1} parent=1 // pred_check_branch
      %90 = sbr.rel (0) target = $region49
    $region48: #{tpu_custom_call.1} parent=1 // pred_region
      %92 = vsyncadd [#allocation9], 0
      %s93 = sshll.u32 %s11, 4
      %s94 = int_to_ptr.hbm [resolvable:$true] %s93
      %s95 = sshll.u32 [#allocation10], 4
      %s96 = int_to_ptr.vmem [resolvable:$true] %s95
      %101 = dma.hbm_to_vmem [thread:$0]  %s94, 512, %s96, [#allocation9], 128, 128, 8
    $region49: #{tpu_custom_call.1} parent=1 // pred_fallthru
      _
    // Predicated region
    $region50: #{tpu_custom_call.1} parent=1 // pred_check
      _
    $region51: #{tpu_custom_call.1} parent=1 // pred_check_branch
      %103 = sbr.rel (0) target = $region53
    $region52: #{tpu_custom_call.1} parent=1 // pred_region
      _
    $region53: #{tpu_custom_call.1} parent=1 // pred_fallthru
      _
    // Predicated region
    $region54: #{tpu_custom_call.1} parent=1 // pred_check
      _
    $region55: #{tpu_custom_call.1} parent=1 // pred_check_branch
      %105 = sbr.rel (0) target = $region57
    $region56: #{tpu_custom_call.1} parent=1 // pred_region
      %107 = vsyncadd [#allocation12], 0
      %s108 = sshll.u32 %s13, 4
      %s109 = int_to_ptr.hbm [resolvable:$true] %s108
      %s110 = sshll.u32 [#allocation11], 4
      %s111 = int_to_ptr.vmem [resolvable:$true] %s110
      %116 = dma.hbm_to_vmem [thread:$0]  %s109, 512, %s111, [#allocation12], 128, 128, 8
    $region57: #{tpu_custom_call.1} parent=1 // pred_fallthru
      _
    // Predicated region
    $region58: #{tpu_custom_call.1} parent=1 // pred_check
      _
    $region59: #{tpu_custom_call.1} parent=1 // pred_check_branch
      %118 = sbr.rel (0) target = $region61
    $region60: #{tpu_custom_call.1} parent=1 // pred_region
      _
    $region61: #{tpu_custom_call.1} parent=1 // pred_fallthru
      _
    // Predicated region
    $region62: #{tpu_custom_call.1} parent=1 // pred_check
      _
    $region63: #{tpu_custom_call.1} parent=1 // pred_check_branch
      %120 = sbr.rel (0) target = $region65
    $region64: #{tpu_custom_call.1} parent=1 // pred_region
      %122 = dma.done [#allocation3], 128
    $region65: #{tpu_custom_call.1} parent=1 // pred_fallthru
      _
    // Predicated region
    $region66: #{tpu_custom_call.1} parent=1 // pred_check
      _
    $region67: #{tpu_custom_call.1} parent=1 // pred_check_branch
      %124 = sbr.rel (0) target = $region69
    $region68: #{tpu_custom_call.1} parent=1 // pred_region
      %126 = dma.done [#allocation6], 384
    $region69: #{tpu_custom_call.1} parent=1 // pred_fallthru
      _
    // Predicated region
    $region70: #{tpu_custom_call.1} parent=1 // pred_check
      _
    $region71: #{tpu_custom_call.1} parent=1 // pred_check_branch
      %128 = sbr.rel (0) target = $region73
    $region72: #{tpu_custom_call.1} parent=1 // pred_region
      %130 = dma.done [#allocation6], 512
    $region73: #{tpu_custom_call.1} parent=1 // pred_fallthru
      _
    // Predicated region
    $region74: #{tpu_custom_call.1} parent=1 // pred_check
      _
    $region75: #{tpu_custom_call.1} parent=1 // pred_check_branch
      %132 = sbr.rel (0) target = $region77
    $region76: #{tpu_custom_call.1} parent=1 // pred_region
      %134 = dma.done [#allocation9], 512
    $region77: #{tpu_custom_call.1} parent=1 // pred_fallthru
      _
    // Predicated region
    $region78: #{tpu_custom_call.1} parent=1 // pred_check
      _
    $region79: #{tpu_custom_call.1} parent=1 // pred_check_branch
      %136 = sbr.rel (0) target = $region81
    $region80: #{tpu_custom_call.1} parent=1 // pred_region
      %138 = dma.done [#allocation9], 512
    $region81: #{tpu_custom_call.1} parent=1 // pred_fallthru
      _
    // Predicated region
    $region82: #{tpu_custom_call.1} parent=1 // pred_check
      _
    $region83: #{tpu_custom_call.1} parent=1 // pred_check_branch
      %140 = sbr.rel (0) target = $region85
    $region84: #{tpu_custom_call.1} parent=1 // pred_region
      %142 = dma.done [#allocation12], 512
    $region85: #{tpu_custom_call.1} parent=1 // pred_fallthru
      _
    %v143 = vld [vmem:[#allocation2] sm:$0xff]
    %v144 = vld [vmem:[#allocation5] sm:$0xff]
    %v145 = vld [vmem:[#allocation5 + $0x8] sm:$0xff]
    %v146 = vld [vmem:[#allocation5 + $0x10] sm:$0x3]
    %v147 = vld [vmem:[%s2] sm:$0x1]
    %v149 = vperm.slane %v147, 0
    %vm151 = vcmask 146432
    %v153 = vsel %vm151, %v143, 0
    %vm155 = vcmask 1041408
    %v157 = vsel %vm155, %v146, 0
    %159 = vmatpush.msra.mxu0 0.0
    %160 = vmatpush.msra.mxu0 0.0
    %161 = vmatpush.msra.mxu0 0.0
    %162 = vmatpush.msra.mxu0 0.0
    %163 = vmatpush.msra.mxu0 0.0
    %164 = vmatpush.msra.mxu0 0.0
    %165 = vmatpush.msra.mxu0 0.0
    %166 = vmatpush.msra.mxu0 0.0
    %167 = vmatpush.msra.mxu0 0.0
    %168 = vmatpush.msra.mxu0 0.0
    %169 = vmatpush.msra.mxu0 0.0
    %170 = vmatpush.msra.mxu0 0.0
    %171 = vmatpush.msra.mxu0 0.0
    %172 = vmatpush.msra.mxu0 %v157
    %173 = vmatpush.msra.mxu0 %v145
    %174 = vmatpush.msra.mxu0 %v144
    %175 = vmatmul.f32.gmra.mxu0 %v153
    %v176 = vpop.f32.mrf.mxu0
    %v177 = vadd.f32 %v149, %v176
    %178 = vdwg.mxu0
    %v179 = vmax.f32 %v177, 0.0
    %v180 = vld [vmem:[%s3] sm:$0x1]
    %v181 = vld [vmem:[%s4] sm:$0x1]
    %vm182 = vcmask 261120
    %v183 = vsel %vm182, %v179, 0.0
    %184 = vadd.xlane.f32.xlu0 %v183
    %v185 = vpop.xlane.xlu0 %184
    %v186 = vrcp.pop 32.0
    %v187 = vmul.f32 32.0, %v186
    %v188 = vsub.f32 1.0, %v187
    %v189 = vmul.f32 %v186, %v188
    %v190 = vadd.f32 %v186, %v189
    %vm191 = vweird.f32 %v186
    %v192 = vsel %vm191, %v186, %v190
    %v193 = vmul.f32 %v185, %v192
    %v194 = vsub.f32 %v179, %v193
    %v195 = vmul.f32 %v194, %v194
    %v196 = vsel %vm182, %v195, 0.0
    %197 = vadd.xlane.f32.xlu0 %v196
    %v198 = vpop.xlane.xlu0 %197
    %v199 = vmul.f32 %v198, %v192
    %v200 = vadd.f32 %v199, 1e-05
    %v201 = vrsqrt.pop %v200
    %v202 = vmul.f32 %v201, %v200
    %v203 = vmul.f32 %v202, %v201
    %v204 = vmul.f32 0.5, %v203
    %v205 = vsub.f32 1.5, %v204
    %v206 = vmul.f32 %v201, %v205
    %vm207 = vweird.f32 %v200
    %vm208 = vweird.f32 %v201
    %vm209 = vmor %vm207, %vm208
    %v210 = vsel %vm209, %v201, %v206
    %v211 = vmul.f32 %v194, %v210
    %v213 = vperm.slane %v180, 0
    %v215 = vmul.f32 %v211, %v213
    %v217 = vperm.slane %v181, 0
    %v219 = vadd.f32 %v215, %v217
    %v220 = vld [vmem:[#allocation7] sm:$0xff]
    %v221 = vld [vmem:[#allocation7 + $0x8] sm:$0xff]
    %v222 = vld [vmem:[#allocation7 + $0x10] sm:$0xff]
    %v223 = vld [vmem:[#allocation7 + $0x18] sm:$0xff]
    %v224 = vld [vmem:[%s6] sm:$0x1]
    %v226 = vperm.slane %v224, 0
    %v229 = vsel %vm182, %v219, 0
    %231 = vmatpush.msra.mxu0 0.0
    %232 = vmatpush.msra.mxu0 0.0
    %233 = vmatpush.msra.mxu0 0.0
    %234 = vmatpush.msra.mxu0 0.0
    %235 = vmatpush.msra.mxu0 0.0
    %236 = vmatpush.msra.mxu0 0.0
    %237 = vmatpush.msra.mxu0 0.0
    %238 = vmatpush.msra.mxu0 0.0
    %239 = vmatpush.msra.mxu0 0.0
    %240 = vmatpush.msra.mxu0 0.0
    %241 = vmatpush.msra.mxu0 0.0
    %242 = vmatpush.msra.mxu0 0.0
    %243 = vmatpush.msra.mxu0 %v223
    %244 = vmatpush.msra.mxu0 %v222
    %245 = vmatpush.msra.mxu0 %v221
    %246 = vmatpush.msra.mxu0 %v220
    %247 = vmatmul.f32.gmra.mxu0 %v229
    %v248 = vpop.f32.mrf.mxu0
    %v249 = vadd.f32 %v226, %v248
    %250 = vdwg.mxu0
    %v251 = vmul.f32 %v249, 0.25
    %v253 = vrot.slane %v251, 2
    %v254 = vrot.slane %v251, 4
    %v255 = vrot.slane %v251, 6
    %v257 = vrot.slane %v249, 2
    %v258 = vrot.slane %v249, 4
    %v259 = vrot.slane %v249, 6
    %260 = vst [vmem:[#allocation1] ss:$4 sm:$0xff] %v249
    %v261 = vld.sshfl [vmem:[#allocation1] sm:$0xff pattern:$0x73625140]
    %262 = vrot.lane.b32.xlu0 %v261, 96
    %v263 = vpop.permute.xlu0 %262
    %vm264 = vcmask 130048
    %v265 = vsel %vm264, %v251, 0
    %v267 = vsel %vm264, %v263, 0
    %269 = vmatpush.xpose.msra.mxu0 0.0
    %270 = vmatpush.xpose.msra.mxu0 0.0
    %271 = vmatpush.xpose.msra.mxu0 0.0
    %272 = vmatpush.xpose.msra.mxu0 0.0
    %273 = vmatpush.xpose.msra.mxu0 0.0
    %274 = vmatpush.xpose.msra.mxu0 0.0
    %275 = vmatpush.xpose.msra.mxu0 0.0
    %276 = vmatpush.xpose.msra.mxu0 0.0
    %277 = vmatpush.xpose.msra.mxu0 0.0
    %278 = vmatpush.xpose.msra.mxu0 0.0
    %279 = vmatpush.xpose.msra.mxu0 0.0
    %280 = vmatpush.xpose.msra.mxu0 0.0
    %281 = vmatpush.xpose.msra.mxu0 0.0
    %282 = vmatpush.xpose.msra.mxu0 0.0
    %283 = vmatpush.xpose.msra.mxu0 0.0
    %284 = vmatpush.xpose.msra.mxu0 %v267
    %285 = vmatmul.f32.gmra.mxu0 %v265
    %v286 = vpop.f32.mrf.mxu0
    %v287 = vadd.f32 0.0, %v286
    %288 = vdwg.mxu0
    %289 = vst [vmem:[#allocation1] ss:$4 sm:$0xff] %v257
    %v290 = vld.sshfl [vmem:[#allocation1] sm:$0xff pattern:$0x73625140]
    %291 = vrot.lane.b32.xlu0 %v290, 96
    %v292 = vpop.permute.xlu0 %291
    %v293 = vsel %vm264, %v253, 0
    %v295 = vsel %vm264, %v292, 0
    %297 = vmatpush.xpose.msra.mxu0 0.0
    %298 = vmatpush.xpose.msra.mxu0 0.0
    %299 = vmatpush.xpose.msra.mxu0 0.0
    %300 = vmatpush.xpose.msra.mxu0 0.0
    %301 = vmatpush.xpose.msra.mxu0 0.0
    %302 = vmatpush.xpose.msra.mxu0 0.0
    %303 = vmatpush.xpose.msra.mxu0 0.0
    %304 = vmatpush.xpose.msra.mxu0 0.0
    %305 = vmatpush.xpose.msra.mxu0 0.0
    %306 = vmatpush.xpose.msra.mxu0 0.0
    %307 = vmatpush.xpose.msra.mxu0 0.0
    %308 = vmatpush.xpose.msra.mxu0 0.0
    %309 = vmatpush.xpose.msra.mxu0 0.0
    %310 = vmatpush.xpose.msra.mxu0 0.0
    %311 = vmatpush.xpose.msra.mxu0 0.0
    %312 = vmatpush.xpose.msra.mxu0 %v295
    %313 = vmatmul.f32.gmra.mxu0 %v293
    %v314 = vpop.f32.mrf.mxu0
    %v315 = vadd.f32 0.0, %v314
    %316 = vdwg.mxu0
    %317 = vst [vmem:[#allocation1] ss:$4 sm:$0xff] %v258
    %v318 = vld.sshfl [vmem:[#allocation1] sm:$0xff pattern:$0x73625140]
    %319 = vrot.lane.b32.xlu0 %v318, 96
    %v320 = vpop.permute.xlu0 %319
    %v321 = vsel %vm264, %v254, 0
    %v323 = vsel %vm264, %v320, 0
    %325 = vmatpush.xpose.msra.mxu0 0.0
    %326 = vmatpush.xpose.msra.mxu0 0.0
    %327 = vmatpush.xpose.msra.mxu0 0.0
    %328 = vmatpush.xpose.msra.mxu0 0.0
    %329 = vmatpush.xpose.msra.mxu0 0.0
    %330 = vmatpush.xpose.msra.mxu0 0.0
    %331 = vmatpush.xpose.msra.mxu0 0.0
    %332 = vmatpush.xpose.msra.mxu0 0.0
    %333 = vmatpush.xpose.msra.mxu0 0.0
    %334 = vmatpush.xpose.msra.mxu0 0.0
    %335 = vmatpush.xpose.msra.mxu0 0.0
    %336 = vmatpush.xpose.msra.mxu0 0.0
    %337 = vmatpush.xpose.msra.mxu0 0.0
    %338 = vmatpush.xpose.msra.mxu0 0.0
    %339 = vmatpush.xpose.msra.mxu0 0.0
    %340 = vmatpush.xpose.msra.mxu0 %v323
    %341 = vmatmul.f32.gmra.mxu0 %v321
    %v342 = vpop.f32.mrf.mxu0
    %v343 = vadd.f32 0.0, %v342
    %344 = vdwg.mxu0
    %345 = vst [vmem:[#allocation1] ss:$4 sm:$0xff] %v259
    %v346 = vld.sshfl [vmem:[#allocation1] sm:$0xff pattern:$0x73625140]
    %347 = vrot.lane.b32.xlu0 %v346, 96
    %v348 = vpop.permute.xlu0 %347
    %v349 = vsel %vm264, %v255, 0
    %v351 = vsel %vm264, %v348, 0
    %353 = vmatpush.xpose.msra.mxu0 0.0
    %354 = vmatpush.xpose.msra.mxu0 0.0
    %355 = vmatpush.xpose.msra.mxu0 0.0
    %356 = vmatpush.xpose.msra.mxu0 0.0
    %357 = vmatpush.xpose.msra.mxu0 0.0
    %358 = vmatpush.xpose.msra.mxu0 0.0
    %359 = vmatpush.xpose.msra.mxu0 0.0
    %360 = vmatpush.xpose.msra.mxu0 0.0
    %361 = vmatpush.xpose.msra.mxu0 0.0
    %362 = vmatpush.xpose.msra.mxu0 0.0
    %363 = vmatpush.xpose.msra.mxu0 0.0
    %364 = vmatpush.xpose.msra.mxu0 0.0
    %365 = vmatpush.xpose.msra.mxu0 0.0
    %366 = vmatpush.xpose.msra.mxu0 0.0
    %367 = vmatpush.xpose.msra.mxu0 0.0
    %368 = vmatpush.xpose.msra.mxu0 %v351
    %369 = vmatmul.f32.gmra.mxu0 %v349
    %v370 = vpop.f32.mrf.mxu0
    %v371 = vadd.f32 0.0, %v370
    %372 = vdwg.mxu0
    %vm373 = vcmask 9216
    %v374 = vsel %vm373, %v287, -inf
    %375 = vmax.xlane.f32.xlu0 %v374
    %v376 = vpop.xlane.xlu0 %375
    %v377 = vsel %vm373, %v315, -inf
    %378 = vmax.xlane.f32.xlu0 %v377
    %v379 = vpop.xlane.xlu0 %378
    %v380 = vsel %vm373, %v343, -inf
    %381 = vmax.xlane.f32.xlu0 %v380
    %v382 = vpop.xlane.xlu0 %381
    %v383 = vsel %vm373, %v371, -inf
    %384 = vmax.xlane.f32.xlu0 %v383
    %v385 = vpop.xlane.xlu0 %384
    %v386 = vsub.f32 %v287, %v376
    %v387 = vsub.f32 %v315, %v379
    %v388 = vsub.f32 %v343, %v382
    %v389 = vsub.f32 %v371, %v385
    %v390 = vmul.f32 %v386, 1.442695
    %v391 = vpow.pop %v390
    %v392 = vmul.f32 %v387, 1.442695
    %v393 = vpow.pop %v392
    %v394 = vmul.f32 %v388, 1.442695
    %v395 = vpow.pop %v394
    %v396 = vmul.f32 %v389, 1.442695
    %v397 = vpow.pop %v396
    %v398 = vsel %vm373, %v391, 0.0
    %399 = vadd.xlane.f32.xlu0 %v398
    %v400 = vpop.xlane.xlu0 %399
    %v401 = vsel %vm373, %v393, 0.0
    %402 = vadd.xlane.f32.xlu0 %v401
    %v403 = vpop.xlane.xlu0 %402
    %v404 = vsel %vm373, %v395, 0.0
    %405 = vadd.xlane.f32.xlu0 %v404
    %v406 = vpop.xlane.xlu0 %405
    %v407 = vsel %vm373, %v397, 0.0
    %408 = vadd.xlane.f32.xlu0 %v407
    %v409 = vpop.xlane.xlu0 %408
    %v410 = vrcp.pop %v400
    %v411 = vmul.f32 %v400, %v410
    %v412 = vsub.f32 1.0, %v411
    %v413 = vmul.f32 %v410, %v412
    %v414 = vadd.f32 %v410, %v413
    %vm415 = vweird.f32 %v400
    %vm416 = vweird.f32 %v410
    %vm417 = vmor %vm415, %vm416
    %v418 = vsel %vm417, %v410, %v414
    %v419 = vand.u32 2147483647, %v400
    %vm420 = vcmp.eq.f32.partialorder %v419, 8.507059e+37
    %v421 = vand.u32 %v400, 2147483648
    %v422 = vor.u32 1.1754944e-38, %v421
    %v423 = vsel %vm420, %v422, %v418
    %v424 = vmul.f32 %v391, %v423
    %v425 = vrcp.pop %v403
    %v426 = vmul.f32 %v403, %v425
    %v427 = vsub.f32 1.0, %v426
    %v428 = vmul.f32 %v425, %v427
    %v429 = vadd.f32 %v425, %v428
    %vm430 = vweird.f32 %v403
    %vm431 = vweird.f32 %v425
    %vm432 = vmor %vm430, %vm431
    %v433 = vsel %vm432, %v425, %v429
    %v434 = vand.u32 2147483647, %v403
    %vm435 = vcmp.eq.f32.partialorder %v434, 8.507059e+37
    %v436 = vand.u32 %v403, 2147483648
    %v437 = vor.u32 1.1754944e-38, %v436
    %v438 = vsel %vm435, %v437, %v433
    %v439 = vmul.f32 %v393, %v438
    %v440 = vrcp.pop %v406
    %v441 = vmul.f32 %v406, %v440
    %v442 = vsub.f32 1.0, %v441
    %v443 = vmul.f32 %v440, %v442
    %v444 = vadd.f32 %v440, %v443
    %vm445 = vweird.f32 %v406
    %vm446 = vweird.f32 %v440
    %vm447 = vmor %vm445, %vm446
    %v448 = vsel %vm447, %v440, %v444
    %v449 = vand.u32 2147483647, %v406
    %vm450 = vcmp.eq.f32.partialorder %v449, 8.507059e+37
    %v451 = vand.u32 %v406, 2147483648
    %v452 = vor.u32 1.1754944e-38, %v451
    %v453 = vsel %vm450, %v452, %v448
    %v454 = vmul.f32 %v395, %v453
    %v455 = vrcp.pop %v409
    %v456 = vmul.f32 %v409, %v455
    %v457 = vsub.f32 1.0, %v456
    %v458 = vmul.f32 %v455, %v457
    %v459 = vadd.f32 %v455, %v458
    %vm460 = vweird.f32 %v409
    %vm461 = vweird.f32 %v455
    %vm462 = vmor %vm460, %vm461
    %v463 = vsel %vm462, %v455, %v459
    %v464 = vand.u32 2147483647, %v409
    %vm465 = vcmp.eq.f32.partialorder %v464, 8.507059e+37
    %v466 = vand.u32 %v409, 2147483648
    %v467 = vor.u32 1.1754944e-38, %v466
    %v468 = vsel %vm465, %v467, %v463
    %v469 = vmul.f32 %v397, %v468
    %470 = vst [vmem:[#allocation1] ss:$4 sm:$0xff] %v249
    %v471 = vld.sshfl [vmem:[#allocation1] sm:$0xff pattern:$0x73625140]
    %472 = vrot.lane.b32.xlu0 %v471, 64
    %v473 = vpop.permute.xlu0 %472
    %vm474 = vcmask 15360
    %v476 = vsel %vm474, %v424, 0
    %v478 = vsel %vm155, %v473, 0
    %480 = vmatpush.msra.mxu0 0.0
    %481 = vmatpush.msra.mxu0 0.0
    %482 = vmatpush.msra.mxu0 0.0
    %483 = vmatpush.msra.mxu0 0.0
    %484 = vmatpush.msra.mxu0 0.0
    %485 = vmatpush.msra.mxu0 0.0
    %486 = vmatpush.msra.mxu0 0.0
    %487 = vmatpush.msra.mxu0 0.0
    %488 = vmatpush.msra.mxu0 0.0
    %489 = vmatpush.msra.mxu0 0.0
    %490 = vmatpush.msra.mxu0 0.0
    %491 = vmatpush.msra.mxu0 0.0
    %492 = vmatpush.msra.mxu0 0.0
    %493 = vmatpush.msra.mxu0 0.0
    %494 = vmatpush.msra.mxu0 0.0
    %495 = vmatpush.msra.mxu0 %v478
    %496 = vmatmul.f32.gmra.mxu0 %v476
    %v497 = vpop.f32.mrf.mxu0
    %v498 = vadd.f32 0.0, %v497
    %499 = vdwg.mxu0
    %500 = vst [vmem:[#allocation1] ss:$4 sm:$0xff] %v257
    %v501 = vld.sshfl [vmem:[#allocation1] sm:$0xff pattern:$0x73625140]
    %502 = vrot.lane.b32.xlu0 %v501, 64
    %v503 = vpop.permute.xlu0 %502
    %v505 = vsel %vm474, %v439, 0
    %v507 = vsel %vm155, %v503, 0
    %509 = vmatpush.msra.mxu0 0.0
    %510 = vmatpush.msra.mxu0 0.0
    %511 = vmatpush.msra.mxu0 0.0
    %512 = vmatpush.msra.mxu0 0.0
    %513 = vmatpush.msra.mxu0 0.0
    %514 = vmatpush.msra.mxu0 0.0
    %515 = vmatpush.msra.mxu0 0.0
    %516 = vmatpush.msra.mxu0 0.0
    %517 = vmatpush.msra.mxu0 0.0
    %518 = vmatpush.msra.mxu0 0.0
    %519 = vmatpush.msra.mxu0 0.0
    %520 = vmatpush.msra.mxu0 0.0
    %521 = vmatpush.msra.mxu0 0.0
    %522 = vmatpush.msra.mxu0 0.0
    %523 = vmatpush.msra.mxu0 0.0
    %524 = vmatpush.msra.mxu0 %v507
    %525 = vmatmul.f32.gmra.mxu0 %v505
    %v526 = vpop.f32.mrf.mxu0
    %v527 = vadd.f32 0.0, %v526
    %528 = vdwg.mxu0
    %529 = vst [vmem:[#allocation1] ss:$4 sm:$0xff] %v258
    %v530 = vld.sshfl [vmem:[#allocation1] sm:$0xff pattern:$0x73625140]
    %531 = vrot.lane.b32.xlu0 %v530, 64
    %v532 = vpop.permute.xlu0 %531
    %v534 = vsel %vm474, %v454, 0
    %v536 = vsel %vm155, %v532, 0
    %538 = vmatpush.msra.mxu0 0.0
    %539 = vmatpush.msra.mxu0 0.0
    %540 = vmatpush.msra.mxu0 0.0
    %541 = vmatpush.msra.mxu0 0.0
    %542 = vmatpush.msra.mxu0 0.0
    %543 = vmatpush.msra.mxu0 0.0
    %544 = vmatpush.msra.mxu0 0.0
    %545 = vmatpush.msra.mxu0 0.0
    %546 = vmatpush.msra.mxu0 0.0
    %547 = vmatpush.msra.mxu0 0.0
    %548 = vmatpush.msra.mxu0 0.0
    %549 = vmatpush.msra.mxu0 0.0
    %550 = vmatpush.msra.mxu0 0.0
    %551 = vmatpush.msra.mxu0 0.0
    %552 = vmatpush.msra.mxu0 0.0
    %553 = vmatpush.msra.mxu0 %v536
    %554 = vmatmul.f32.gmra.mxu0 %v534
    %v555 = vpop.f32.mrf.mxu0
    %v556 = vadd.f32 0.0, %v555
    %557 = vdwg.mxu0
    %558 = vst [vmem:[#allocation1] ss:$4 sm:$0xff] %v259
    %v559 = vld.sshfl [vmem:[#allocation1] sm:$0xff pattern:$0x73625140]
    %560 = vrot.lane.b32.xlu0 %v559, 64
    %v561 = vpop.permute.xlu0 %560
    %v563 = vsel %vm474, %v469, 0
    %v565 = vsel %vm155, %v561, 0
    %567 = vmatpush.msra.mxu0 0.0
    %568 = vmatpush.msra.mxu0 0.0
    %569 = vmatpush.msra.mxu0 0.0
    %570 = vmatpush.msra.mxu0 0.0
    %571 = vmatpush.msra.mxu0 0.0
    %572 = vmatpush.msra.mxu0 0.0
    %573 = vmatpush.msra.mxu0 0.0
    %574 = vmatpush.msra.mxu0 0.0
    %575 = vmatpush.msra.mxu0 0.0
    %576 = vmatpush.msra.mxu0 0.0
    %577 = vmatpush.msra.mxu0 0.0
    %578 = vmatpush.msra.mxu0 0.0
    %579 = vmatpush.msra.mxu0 0.0
    %580 = vmatpush.msra.mxu0 0.0
    %581 = vmatpush.msra.mxu0 0.0
    %582 = vmatpush.msra.mxu0 %v565
    %583 = vmatmul.f32.gmra.mxu0 %v563
    %v584 = vpop.f32.mrf.mxu0
    %v585 = vadd.f32 0.0, %v584
    %586 = vdwg.mxu0
    %587 = vst [vmem:[#allocation1] ss:$4 sm:$0xff] %v251
    %v588 = vld.sshfl [vmem:[#allocation1] sm:$0xff pattern:$0x73625140]
    %589 = vrot.lane.b32.xlu0 %v588, 112
    %v590 = vpop.permute.xlu0 %589
    %591 = vst [vmem:[#allocation1] ss:$4 sm:$0xff] %v249
    %v592 = vld.sshfl [vmem:[#allocation1] sm:$0xff pattern:$0x73625140]
    %593 = vrot.lane.b32.xlu0 %v592, 80
    %v594 = vpop.permute.xlu0 %593
    %v595 = vsel %vm264, %v590, 0
    %v597 = vsel %vm264, %v594, 0
    %599 = vmatpush.xpose.msra.mxu0 0.0
    %600 = vmatpush.xpose.msra.mxu0 0.0
    %601 = vmatpush.xpose.msra.mxu0 0.0
    %602 = vmatpush.xpose.msra.mxu0 0.0
    %603 = vmatpush.xpose.msra.mxu0 0.0
    %604 = vmatpush.xpose.msra.mxu0 0.0
    %605 = vmatpush.xpose.msra.mxu0 0.0
    %606 = vmatpush.xpose.msra.mxu0 0.0
    %607 = vmatpush.xpose.msra.mxu0 0.0
    %608 = vmatpush.xpose.msra.mxu0 0.0
    %609 = vmatpush.xpose.msra.mxu0 0.0
    %610 = vmatpush.xpose.msra.mxu0 0.0
    %611 = vmatpush.xpose.msra.mxu0 0.0
    %612 = vmatpush.xpose.msra.mxu0 0.0
    %613 = vmatpush.xpose.msra.mxu0 0.0
    %614 = vmatpush.xpose.msra.mxu0 %v597
    %615 = vmatmul.f32.gmra.mxu0 %v595
    %v616 = vpop.f32.mrf.mxu0
    %v617 = vadd.f32 0.0, %v616
    %618 = vdwg.mxu0
    %619 = vst [vmem:[#allocation1] ss:$4 sm:$0xff] %v253
    %v620 = vld.sshfl [vmem:[#allocation1] sm:$0xff pattern:$0x73625140]
    %621 = vrot.lane.b32.xlu0 %v620, 112
    %v622 = vpop.permute.xlu0 %621
    %623 = vst [vmem:[#allocation1] ss:$4 sm:$0xff] %v257
    %v624 = vld.sshfl [vmem:[#allocation1] sm:$0xff pattern:$0x73625140]
    %625 = vrot.lane.b32.xlu0 %v624, 80
    %v626 = vpop.permute.xlu0 %625
    %v627 = vsel %vm264, %v622, 0
    %v629 = vsel %vm264, %v626, 0
    %631 = vmatpush.xpose.msra.mxu0 0.0
    %632 = vmatpush.xpose.msra.mxu0 0.0
    %633 = vmatpush.xpose.msra.mxu0 0.0
    %634 = vmatpush.xpose.msra.mxu0 0.0
    %635 = vmatpush.xpose.msra.mxu0 0.0
    %636 = vmatpush.xpose.msra.mxu0 0.0
    %637 = vmatpush.xpose.msra.mxu0 0.0
    %638 = vmatpush.xpose.msra.mxu0 0.0
    %639 = vmatpush.xpose.msra.mxu0 0.0
    %640 = vmatpush.xpose.msra.mxu0 0.0
    %641 = vmatpush.xpose.msra.mxu0 0.0
    %642 = vmatpush.xpose.msra.mxu0 0.0
    %643 = vmatpush.xpose.msra.mxu0 0.0
    %644 = vmatpush.xpose.msra.mxu0 0.0
    %645 = vmatpush.xpose.msra.mxu0 0.0
    %646 = vmatpush.xpose.msra.mxu0 %v629
    %647 = vmatmul.f32.gmra.mxu0 %v627
    %v648 = vpop.f32.mrf.mxu0
    %v649 = vadd.f32 0.0, %v648
    %650 = vdwg.mxu0
    %651 = vst [vmem:[#allocation1] ss:$4 sm:$0xff] %v254
    %v652 = vld.sshfl [vmem:[#allocation1] sm:$0xff pattern:$0x73625140]
    %653 = vrot.lane.b32.xlu0 %v652, 112
    %v654 = vpop.permute.xlu0 %653
    %655 = vst [vmem:[#allocation1] ss:$4 sm:$0xff] %v258
    %v656 = vld.sshfl [vmem:[#allocation1] sm:$0xff pattern:$0x73625140]
    %657 = vrot.lane.b32.xlu0 %v656, 80
    %v658 = vpop.permute.xlu0 %657
    %v659 = vsel %vm264, %v654, 0
    %v661 = vsel %vm264, %v658, 0
    %663 = vmatpush.xpose.msra.mxu0 0.0
    %664 = vmatpush.xpose.msra.mxu0 0.0
    %665 = vmatpush.xpose.msra.mxu0 0.0
    %666 = vmatpush.xpose.msra.mxu0 0.0
    %667 = vmatpush.xpose.msra.mxu0 0.0
    %668 = vmatpush.xpose.msra.mxu0 0.0
    %669 = vmatpush.xpose.msra.mxu0 0.0
    %670 = vmatpush.xpose.msra.mxu0 0.0
    %671 = vmatpush.xpose.msra.mxu0 0.0
    %672 = vmatpush.xpose.msra.mxu0 0.0
    %673 = vmatpush.xpose.msra.mxu0 0.0
    %674 = vmatpush.xpose.msra.mxu0 0.0
    %675 = vmatpush.xpose.msra.mxu0 0.0
    %676 = vmatpush.xpose.msra.mxu0 0.0
    %677 = vmatpush.xpose.msra.mxu0 0.0
    %678 = vmatpush.xpose.msra.mxu0 %v661
    %679 = vmatmul.f32.gmra.mxu0 %v659
    %v680 = vpop.f32.mrf.mxu0
    %v681 = vadd.f32 0.0, %v680
    %682 = vdwg.mxu0
    %683 = vst [vmem:[#allocation1] ss:$4 sm:$0xff] %v255
    %v684 = vld.sshfl [vmem:[#allocation1] sm:$0xff pattern:$0x73625140]
    %685 = vrot.lane.b32.xlu0 %v684, 112
    %v686 = vpop.permute.xlu0 %685
    %687 = vst [vmem:[#allocation1] ss:$4 sm:$0xff] %v259
    %v688 = vld.sshfl [vmem:[#allocation1] sm:$0xff pattern:$0x73625140]
    %689 = vrot.lane.b32.xlu0 %v688, 80
    %v690 = vpop.permute.xlu0 %689
    %v691 = vsel %vm264, %v686, 0
    %v693 = vsel %vm264, %v690, 0
    %695 = vmatpush.xpose.msra.mxu0 0.0
    %696 = vmatpush.xpose.msra.mxu0 0.0
    %697 = vmatpush.xpose.msra.mxu0 0.0
    %698 = vmatpush.xpose.msra.mxu0 0.0
    %699 = vmatpush.xpose.msra.mxu0 0.0
    %700 = vmatpush.xpose.msra.mxu0 0.0
    %701 = vmatpush.xpose.msra.mxu0 0.0
    %702 = vmatpush.xpose.msra.mxu0 0.0
    %703 = vmatpush.xpose.msra.mxu0 0.0
    %704 = vmatpush.xpose.msra.mxu0 0.0
    %705 = vmatpush.xpose.msra.mxu0 0.0
    %706 = vmatpush.xpose.msra.mxu0 0.0
    %707 = vmatpush.xpose.msra.mxu0 0.0
    %708 = vmatpush.xpose.msra.mxu0 0.0
    %709 = vmatpush.xpose.msra.mxu0 0.0
    %710 = vmatpush.xpose.msra.mxu0 %v693
    %711 = vmatmul.f32.gmra.mxu0 %v691
    %v712 = vpop.f32.mrf.mxu0
    %v713 = vadd.f32 0.0, %v712
    %714 = vdwg.mxu0
    %v715 = vsel %vm373, %v617, -inf
    %716 = vmax.xlane.f32.xlu0 %v715
    %v717 = vpop.xlane.xlu0 %716
    %v718 = vsel %vm373, %v649, -inf
    %719 = vmax.xlane.f32.xlu0 %v718
    %v720 = vpop.xlane.xlu0 %719
    %v721 = vsel %vm373, %v681, -inf
    %722 = vmax.xlane.f32.xlu0 %v721
    %v723 = vpop.xlane.xlu0 %722
    %v724 = vsel %vm373, %v713, -inf
    %725 = vmax.xlane.f32.xlu0 %v724
    %v726 = vpop.xlane.xlu0 %725
    %v727 = vsub.f32 %v617, %v717
    %v728 = vsub.f32 %v649, %v720
    %v729 = vsub.f32 %v681, %v723
    %v730 = vsub.f32 %v713, %v726
    %v731 = vmul.f32 %v727, 1.442695
    %v732 = vpow.pop %v731
    %v733 = vmul.f32 %v728, 1.442695
    %v734 = vpow.pop %v733
    %v735 = vmul.f32 %v729, 1.442695
    %v736 = vpow.pop %v735
    %v737 = vmul.f32 %v730, 1.442695
    %v738 = vpow.pop %v737
    %v739 = vsel %vm373, %v732, 0.0
    %740 = vadd.xlane.f32.xlu0 %v739
    %v741 = vpop.xlane.xlu0 %740
    %v742 = vsel %vm373, %v734, 0.0
    %743 = vadd.xlane.f32.xlu0 %v742
    %v744 = vpop.xlane.xlu0 %743
    %v745 = vsel %vm373, %v736, 0.0
    %746 = vadd.xlane.f32.xlu0 %v745
    %v747 = vpop.xlane.xlu0 %746
    %v748 = vsel %vm373, %v738, 0.0
    %749 = vadd.xlane.f32.xlu0 %v748
    %v750 = vpop.xlane.xlu0 %749
    %v751 = vrcp.pop %v741
    %v752 = vmul.f32 %v741, %v751
    %v753 = vsub.f32 1.0, %v752
    %v754 = vmul.f32 %v751, %v753
    %v755 = vadd.f32 %v751, %v754
    %vm756 = vweird.f32 %v741
    %vm757 = vweird.f32 %v751
    %vm758 = vmor %vm756, %vm757
    %v759 = vsel %vm758, %v751, %v755
    %v760 = vand.u32 2147483647, %v741
    %vm761 = vcmp.eq.f32.partialorder %v760, 8.507059e+37
    %v762 = vand.u32 %v741, 2147483648
    %v763 = vor.u32 1.1754944e-38, %v762
    %v764 = vsel %vm761, %v763, %v759
    %v765 = vmul.f32 %v732, %v764
    %v766 = vrcp.pop %v744
    %v767 = vmul.f32 %v744, %v766
    %v768 = vsub.f32 1.0, %v767
    %v769 = vmul.f32 %v766, %v768
    %v770 = vadd.f32 %v766, %v769
    %vm771 = vweird.f32 %v744
    %vm772 = vweird.f32 %v766
    %vm773 = vmor %vm771, %vm772
    %v774 = vsel %vm773, %v766, %v770
    %v775 = vand.u32 2147483647, %v744
    %vm776 = vcmp.eq.f32.partialorder %v775, 8.507059e+37
    %v777 = vand.u32 %v744, 2147483648
    %v778 = vor.u32 1.1754944e-38, %v777
    %v779 = vsel %vm776, %v778, %v774
    %v780 = vmul.f32 %v734, %v779
    %v781 = vrcp.pop %v747
    %v782 = vmul.f32 %v747, %v781
    %v783 = vsub.f32 1.0, %v782
    %v784 = vmul.f32 %v781, %v783
    %v785 = vadd.f32 %v781, %v784
    %vm786 = vweird.f32 %v747
    %vm787 = vweird.f32 %v781
    %vm788 = vmor %vm786, %vm787
    %v789 = vsel %vm788, %v781, %v785
    %v790 = vand.u32 2147483647, %v747
    %vm791 = vcmp.eq.f32.partialorder %v790, 8.507059e+37
    %v792 = vand.u32 %v747, 2147483648
    %v793 = vor.u32 1.1754944e-38, %v792
    %v794 = vsel %vm791, %v793, %v789
    %v795 = vmul.f32 %v736, %v794
    %v796 = vrcp.pop %v750
    %v797 = vmul.f32 %v750, %v796
    %v798 = vsub.f32 1.0, %v797
    %v799 = vmul.f32 %v796, %v798
    %v800 = vadd.f32 %v796, %v799
    %vm801 = vweird.f32 %v750
    %vm802 = vweird.f32 %v796
    %vm803 = vmor %vm801, %vm802
    %v804 = vsel %vm803, %v796, %v800
    %v805 = vand.u32 2147483647, %v750
    %vm806 = vcmp.eq.f32.partialorder %v805, 8.507059e+37
    %v807 = vand.u32 %v750, 2147483648
    %v808 = vor.u32 1.1754944e-38, %v807
    %v809 = vsel %vm806, %v808, %v804
    %v810 = vmul.f32 %v738, %v809
    %811 = vst [vmem:[#allocation1] ss:$4 sm:$0xff] %v249
    %v812 = vld.sshfl [vmem:[#allocation1] sm:$0xff pattern:$0x73625140]
    %813 = vrot.lane.b32.xlu0 %v812, 48
    %v814 = vpop.permute.xlu0 %813
    %v816 = vsel %vm474, %v765, 0
    %v818 = vsel %vm155, %v814, 0
    %820 = vmatpush.msra.mxu0 0.0
    %821 = vmatpush.msra.mxu0 0.0
    %822 = vmatpush.msra.mxu0 0.0
    %823 = vmatpush.msra.mxu0 0.0
    %824 = vmatpush.msra.mxu0 0.0
    %825 = vmatpush.msra.mxu0 0.0
    %826 = vmatpush.msra.mxu0 0.0
    %827 = vmatpush.msra.mxu0 0.0
    %828 = vmatpush.msra.mxu0 0.0
    %829 = vmatpush.msra.mxu0 0.0
    %830 = vmatpush.msra.mxu0 0.0
    %831 = vmatpush.msra.mxu0 0.0
    %832 = vmatpush.msra.mxu0 0.0
    %833 = vmatpush.msra.mxu0 0.0
    %834 = vmatpush.msra.mxu0 0.0
    %835 = vmatpush.msra.mxu0 %v818
    %836 = vmatmul.f32.gmra.mxu0 %v816
    %v837 = vpop.f32.mrf.mxu0
    %v838 = vadd.f32 0.0, %v837
    %839 = vdwg.mxu0
    %840 = vst [vmem:[#allocation1] ss:$4 sm:$0xff] %v257
    %v841 = vld.sshfl [vmem:[#allocation1] sm:$0xff pattern:$0x73625140]
    %842 = vrot.lane.b32.xlu0 %v841, 48
    %v843 = vpop.permute.xlu0 %842
    %v845 = vsel %vm474, %v780, 0
    %v847 = vsel %vm155, %v843, 0
    %849 = vmatpush.msra.mxu0 0.0
    %850 = vmatpush.msra.mxu0 0.0
    %851 = vmatpush.msra.mxu0 0.0
    %852 = vmatpush.msra.mxu0 0.0
    %853 = vmatpush.msra.mxu0 0.0
    %854 = vmatpush.msra.mxu0 0.0
    %855 = vmatpush.msra.mxu0 0.0
    %856 = vmatpush.msra.mxu0 0.0
    %857 = vmatpush.msra.mxu0 0.0
    %858 = vmatpush.msra.mxu0 0.0
    %859 = vmatpush.msra.mxu0 0.0
    %860 = vmatpush.msra.mxu0 0.0
    %861 = vmatpush.msra.mxu0 0.0
    %862 = vmatpush.msra.mxu0 0.0
    %863 = vmatpush.msra.mxu0 0.0
    %864 = vmatpush.msra.mxu0 %v847
    %865 = vmatmul.f32.gmra.mxu0 %v845
    %v866 = vpop.f32.mrf.mxu0
    %v867 = vadd.f32 0.0, %v866
    %868 = vdwg.mxu0
    %869 = vst [vmem:[#allocation1] ss:$4 sm:$0xff] %v258
    %v870 = vld.sshfl [vmem:[#allocation1] sm:$0xff pattern:$0x73625140]
    %871 = vrot.lane.b32.xlu0 %v870, 48
    %v872 = vpop.permute.xlu0 %871
    %v874 = vsel %vm474, %v795, 0
    %v876 = vsel %vm155, %v872, 0
    %878 = vmatpush.msra.mxu0 0.0
    %879 = vmatpush.msra.mxu0 0.0
    %880 = vmatpush.msra.mxu0 0.0
    %881 = vmatpush.msra.mxu0 0.0
    %882 = vmatpush.msra.mxu0 0.0
    %883 = vmatpush.msra.mxu0 0.0
    %884 = vmatpush.msra.mxu0 0.0
    %885 = vmatpush.msra.mxu0 0.0
    %886 = vmatpush.msra.mxu0 0.0
    %887 = vmatpush.msra.mxu0 0.0
    %888 = vmatpush.msra.mxu0 0.0
    %889 = vmatpush.msra.mxu0 0.0
    %890 = vmatpush.msra.mxu0 0.0
    %891 = vmatpush.msra.mxu0 0.0
    %892 = vmatpush.msra.mxu0 0.0
    %893 = vmatpush.msra.mxu0 %v876
    %894 = vmatmul.f32.gmra.mxu0 %v874
    %v895 = vpop.f32.mrf.mxu0
    %v896 = vadd.f32 0.0, %v895
    %897 = vdwg.mxu0
    %898 = vst [vmem:[#allocation1] ss:$4 sm:$0xff] %v259
    %v899 = vld.sshfl [vmem:[#allocation1] sm:$0xff pattern:$0x73625140]
    %900 = vrot.lane.b32.xlu0 %v899, 48
    %v901 = vpop.permute.xlu0 %900
    %v903 = vsel %vm474, %v810, 0
    %v905 = vsel %vm155, %v901, 0
    %907 = vmatpush.msra.mxu0 0.0
    %908 = vmatpush.msra.mxu0 0.0
    %909 = vmatpush.msra.mxu0 0.0
    %910 = vmatpush.msra.mxu0 0.0
    %911 = vmatpush.msra.mxu0 0.0
    %912 = vmatpush.msra.mxu0 0.0
    %913 = vmatpush.msra.mxu0 0.0
    %914 = vmatpush.msra.mxu0 0.0
    %915 = vmatpush.msra.mxu0 0.0
    %916 = vmatpush.msra.mxu0 0.0
    %917 = vmatpush.msra.mxu0 0.0
    %918 = vmatpush.msra.mxu0 0.0
    %919 = vmatpush.msra.mxu0 0.0
    %920 = vmatpush.msra.mxu0 0.0
    %921 = vmatpush.msra.mxu0 0.0
    %922 = vmatpush.msra.mxu0 %v905
    %923 = vmatmul.f32.gmra.mxu0 %v903
    %v924 = vpop.f32.mrf.mxu0
    %v925 = vadd.f32 0.0, %v924
    %926 = vdwg.mxu0
    %931 = vst [vmem:[#allocation1] ss:$4 sm:$0xff] %v498
    %s932 = scalar_lea.vmem [#allocation1], 1
    %933 = vst [vmem:[%s932] ss:$4 sm:$0xff] %v527
    %s934 = scalar_lea.vmem [#allocation1], 2
    %935 = vst [vmem:[%s934] ss:$4 sm:$0xff] %v556
    %s936 = scalar_lea.vmem [#allocation1], 3
    %937 = vst [vmem:[%s936] ss:$4 sm:$0xff] %v585
    %v938 = vld.sshfl [vmem:[#allocation1] sm:$0xff pattern:$0x73625140]
    %944 = vst [vmem:[#allocation1] ss:$4 sm:$0xff] %v838
    %s945 = scalar_lea.vmem [#allocation1], 1
    %946 = vst [vmem:[%s945] ss:$4 sm:$0xff] %v867
    %s947 = scalar_lea.vmem [#allocation1], 2
    %948 = vst [vmem:[%s947] ss:$4 sm:$0xff] %v896
    %s949 = scalar_lea.vmem [#allocation1], 3
    %950 = vst [vmem:[%s949] ss:$4 sm:$0xff] %v925
    %v951 = vld.sshfl [vmem:[#allocation1] sm:$0xff pattern:$0x73625140]
    %952 = vrot.lane.b32.xlu0 %v951, 16
    %v953 = vpop.permute.xlu0 %952
    %v955 = vsel %vm264, %v938, %v953
    %v956 = vld [vmem:[#allocation8] sm:$0xff]
    %v957 = vld [vmem:[#allocation8 + $0x8] sm:$0xff]
    %v958 = vld [vmem:[#allocation8 + $0x10] sm:$0xff]
    %v959 = vld [vmem:[#allocation8 + $0x18] sm:$0xff]
    %v960 = vld [vmem:[%s8] sm:$0x1]
    %v962 = vperm.slane %v960, 0
    %v965 = vsel %vm182, %v955, 0
    %967 = vmatpush.msra.mxu0 0.0
    %968 = vmatpush.msra.mxu0 0.0
    %969 = vmatpush.msra.mxu0 0.0
    %970 = vmatpush.msra.mxu0 0.0
    %971 = vmatpush.msra.mxu0 0.0
    %972 = vmatpush.msra.mxu0 0.0
    %973 = vmatpush.msra.mxu0 0.0
    %974 = vmatpush.msra.mxu0 0.0
    %975 = vmatpush.msra.mxu0 0.0
    %976 = vmatpush.msra.mxu0 0.0
    %977 = vmatpush.msra.mxu0 0.0
    %978 = vmatpush.msra.mxu0 0.0
    %979 = vmatpush.msra.mxu0 %v959
    %980 = vmatpush.msra.mxu0 %v958
    %981 = vmatpush.msra.mxu0 %v957
    %982 = vmatpush.msra.mxu0 %v956
    %983 = vmatmul.f32.gmra.mxu0 %v965
    %v984 = vpop.f32.mrf.mxu0
    %v985 = vadd.f32 %v962, %v984
    %986 = vdwg.mxu0
    %v987 = vadd.f32 %v179, %v985
    %v988 = vld [vmem:[%s9] sm:$0x1]
    %v989 = vld [vmem:[%s10] sm:$0x1]
    %v990 = vsel %vm182, %v987, 0.0
    %991 = vadd.xlane.f32.xlu0 %v990
    %v992 = vpop.xlane.xlu0 %991
    %v993 = vmul.f32 %v992, %v192
    %v994 = vsub.f32 %v987, %v993
    %v995 = vmul.f32 %v994, %v994
    %v996 = vsel %vm182, %v995, 0.0
    %997 = vadd.xlane.f32.xlu0 %v996
    %v998 = vpop.xlane.xlu0 %997
    %v999 = vmul.f32 %v998, %v192
    %v1000 = vadd.f32 %v999, 1e-05
    %v1001 = vrsqrt.pop %v1000
    %v1002 = vmul.f32 %v1001, %v1000
    %v1003 = vmul.f32 %v1002, %v1001
    %v1004 = vmul.f32 0.5, %v1003
    %v1005 = vsub.f32 1.5, %v1004
    %v1006 = vmul.f32 %v1001, %v1005
    %vm1007 = vweird.f32 %v1000
    %vm1008 = vweird.f32 %v1001
    %vm1009 = vmor %vm1007, %vm1008
    %v1010 = vsel %vm1009, %v1001, %v1006
    %v1011 = vmul.f32 %v994, %v1010
    %v1013 = vperm.slane %v988, 0
    %v1015 = vmul.f32 %v1011, %v1013
    %v1017 = vperm.slane %v989, 0
    %v1019 = vadd.f32 %v1015, %v1017
    %v1020 = vld [vmem:[#allocation10] sm:$0xff]
    %v1021 = vld [vmem:[#allocation10 + $0x8] sm:$0xff]
    %v1022 = vld [vmem:[#allocation10 + $0x10] sm:$0xff]
    %v1023 = vld [vmem:[#allocation10 + $0x18] sm:$0xff]
    %v1024 = vld [vmem:[%s12] sm:$0x1]
    %v1026 = vperm.slane %v1024, 0
    %v1029 = vsel %vm182, %v1019, 0
    %1031 = vmatpush.msra.mxu0 0.0
    %1032 = vmatpush.msra.mxu0 0.0
    %1033 = vmatpush.msra.mxu0 0.0
    %1034 = vmatpush.msra.mxu0 0.0
    %1035 = vmatpush.msra.mxu0 0.0
    %1036 = vmatpush.msra.mxu0 0.0
    %1037 = vmatpush.msra.mxu0 0.0
    %1038 = vmatpush.msra.mxu0 0.0
    %1039 = vmatpush.msra.mxu0 0.0
    %1040 = vmatpush.msra.mxu0 0.0
    %1041 = vmatpush.msra.mxu0 0.0
    %1042 = vmatpush.msra.mxu0 0.0
    %1043 = vmatpush.msra.mxu0 %v1023
    %1044 = vmatpush.msra.mxu0 %v1022
    %1045 = vmatpush.msra.mxu0 %v1021
    %1046 = vmatpush.msra.mxu0 %v1020
    %1047 = vmatmul.f32.gmra.mxu0 %v1029
    %v1048 = vpop.f32.mrf.mxu0
    %v1049 = vadd.f32 %v1026, %v1048
    %1050 = vdwg.mxu0
    %v1051 = vmax.f32 %v1049, 0.0
    %v1052 = vld [vmem:[#allocation11] sm:$0xff]
    %v1053 = vld [vmem:[#allocation11 + $0x8] sm:$0xff]
    %v1054 = vld [vmem:[#allocation11 + $0x10] sm:$0xff]
    %v1055 = vld [vmem:[#allocation11 + $0x18] sm:$0xff]
    %v1056 = vld [vmem:[%s14] sm:$0x1]
    %v1058 = vperm.slane %v1056, 0
    %v1061 = vsel %vm182, %v1051, 0
    %1063 = vmatpush.msra.mxu0 0.0
    %1064 = vmatpush.msra.mxu0 0.0
    %1065 = vmatpush.msra.mxu0 0.0
    %1066 = vmatpush.msra.mxu0 0.0
    %1067 = vmatpush.msra.mxu0 0.0
    %1068 = vmatpush.msra.mxu0 0.0
    %1069 = vmatpush.msra.mxu0 0.0
    %1070 = vmatpush.msra.mxu0 0.0
    %1071 = vmatpush.msra.mxu0 0.0
    %1072 = vmatpush.msra.mxu0 0.0
    %1073 = vmatpush.msra.mxu0 0.0
    %1074 = vmatpush.msra.mxu0 0.0
    %1075 = vmatpush.msra.mxu0 %v1055
    %1076 = vmatpush.msra.mxu0 %v1054
    %1077 = vmatpush.msra.mxu0 %v1053
    %1078 = vmatpush.msra.mxu0 %v1052
    %1079 = vmatmul.f32.gmra.mxu0 %v1061
    %v1080 = vpop.f32.mrf.mxu0
    %v1081 = vadd.f32 %v1058, %v1080
    %1082 = vdwg.mxu0
    %v1083 = vadd.f32 %v987, %v1081
    %v1085 = vrot.slane %v1083, 2
    %v1086 = vrot.slane %v1083, 4
    %v1087 = vrot.slane %v1083, 6
    %vm1091 = vcmask 254976
    %v1092 = vsel %vm1091, %v1083, 0.0
    %v1093 = vrot.slane %v1092, 4
    %v1094 = vadd.f32 %v1092, %v1093
    %v1095 = vrot.slane %v1094, 2
    %v1096 = vadd.f32 %v1094, %v1095
    %v1097 = vrot.slane %v1096, 1
    %v1098 = vadd.f32 %v1096, %v1097
    %v1099 = vsel %vm1091, %v1085, 0.0
    %v1100 = vrot.slane %v1099, 4
    %v1101 = vadd.f32 %v1099, %v1100
    %v1102 = vrot.slane %v1101, 2
    %v1103 = vadd.f32 %v1101, %v1102
    %v1104 = vrot.slane %v1103, 1
    %v1105 = vadd.f32 %v1103, %v1104
    %v1106 = vsel %vm1091, %v1086, 0.0
    %v1107 = vrot.slane %v1106, 4
    %v1108 = vadd.f32 %v1106, %v1107
    %v1109 = vrot.slane %v1108, 2
    %v1110 = vadd.f32 %v1108, %v1109
    %v1111 = vrot.slane %v1110, 1
    %v1112 = vadd.f32 %v1110, %v1111
    %v1113 = vsel %vm1091, %v1087, 0.0
    %v1114 = vrot.slane %v1113, 4
    %v1115 = vadd.f32 %v1113, %v1114
    %v1116 = vrot.slane %v1115, 2
    %v1117 = vadd.f32 %v1115, %v1116
    %v1118 = vrot.slane %v1117, 1
    %v1119 = vadd.f32 %v1117, %v1118
    %v1120 = vrcp.pop 2.0
    %v1121 = vmul.f32 2.0, %v1120
    %v1122 = vsub.f32 1.0, %v1121
    %v1123 = vmul.f32 %v1120, %v1122
    %v1124 = vadd.f32 %v1120, %v1123
    %vm1125 = vweird.f32 %v1120
    %v1126 = vsel %vm1125, %v1120, %v1124
    %v1127 = vmul.f32 %v1098, %v1126
    %v1128 = vmul.f32 %v1105, %v1126
    %v1129 = vmul.f32 %v1112, %v1126
    %v1130 = vmul.f32 %v1119, %v1126
    %vm1135 = vcmask 1041409
    %v1136 = vsel %vm1135, %v1128, %v1127
    %vm1137 = vcmask 1042434
    %v1138 = vsel %vm1137, %v1129, %v1136
    %vm1139 = vcmask 1043459
    %v1140 = vsel %vm1139, %v1130, %v1138
    %vm1142 = vcmask 257024
    %1143 = vst.msk [vmem:[#allocation13] sm:$0xf] %vm1142, %v1140
    // Predicated region
    $region86: #{tpu_custom_call.1} parent=1 // pred_check
      _
    $region87: #{tpu_custom_call.1} parent=1 // pred_check_branch
      %1145 = sbr.rel (0) target = $region89
    $region88: #{tpu_custom_call.1} parent=1 // pred_region
      %1147 = vsyncadd [#allocation4], 0
      %s1149 = sshll.u32 [#allocation13], 4
      %s1150 = int_to_ptr.vmem [resolvable:$true] %s1149
      %s1151 = sshll.u32 %s15, 4
      %s1152 = int_to_ptr.hbm [resolvable:$true] %s1151
      %1154 = dma.vmem_to_hbm [thread:$0]  %s1150, 64, %s1152, [#allocation4]
    $region89: #{tpu_custom_call.1} parent=1 // pred_fallthru
      _
    // Predicated region
    $region90: #{tpu_custom_call.1} parent=1 // pred_check
      _
    $region91: #{tpu_custom_call.1} parent=1 // pred_check_branch
      %1156 = sbr.rel (0) target = $region93
    $region92: #{tpu_custom_call.1} parent=1 // pred_region
      %1158 = dma.done [#allocation4], 64
    $region93: #{tpu_custom_call.1} parent=1 // pred_fallthru
      _
    %1159 = vsyncpa [#allocation3], 1
    %1160 = vsyncpa [#allocation6], 1
    %1161 = vsyncpa [#allocation9], 1
    %1162 = vsyncpa [#allocation12], 1
    %1163 = vsyncpa [#allocation4], 1

</llo_original>
